<compile_context>
chip_gen: v7x
topology: tpu7x:2x2x1
jax: 0.10.0
libtpu: 0.0.40
codegen_flags: <defaults>
</compile_context>

<pallas_src>
import functools

import jax
import jax.numpy as jnp
from jax.experimental import pallas as pl
from jax.experimental.pallas import tpu as pltpu


# ---------------------------------------------------------------------------
# In-kernel conv tile: K accumulated (c_tile, C_in) x (C_in, l_tile) matmuls.
# ---------------------------------------------------------------------------
def _conv_tile(x_ref, w_ref, *, K, dilation, stride, l_tile):
    """f32 conv-output tile (c_tile, l_tile) from a halo'd x window.

      x_ref : (C_in, (l_tile-1)*stride + (K-1)*dilation + 1)
      w_ref : (K, c_tile, C_in)
    """
    c_tile = w_ref.shape[1]
    y = jnp.zeros((c_tile, l_tile), jnp.float32)
    for k in range(K):                               # K is small & static -> unrolled
        if stride == 1:
            xk = x_ref[:, pl.ds(k * dilation, l_tile)]
        else:
            xk = x_ref[:, pl.ds(k * dilation, l_tile, stride)]
        y = y + jnp.dot(w_ref[k], xk, preferred_element_type=jnp.float32)
    return y


# ---------------------------------------------------------------------------
# Pass 1: per-channel BN statistics -> fused (scale, shift).
# Grid = (c_tiles, B, l_tiles); (b, l) are streamed reduction axes.
# ---------------------------------------------------------------------------
def bn_stats_kernel(x_ref, w_ref, gb_ref, ss_ref, *,
                    K, dilation, stride, l_tile, n_valid, eps):
    b = pl.program_id(1)
    l = pl.program_id(2)

    @pl.when(jnp.logical_and(b == 0, l == 0))
    def _init():
        ss_ref[...] = jnp.zeros_like(ss_ref)

    y = _conv_tile(x_ref, w_ref, K=K, dilation=dilation, stride=stride,
                   l_tile=l_tile)

    # Zero-padded tail columns produce y == 0 (no bias), so they contribute
    # nothing; divide by the true element count n_valid.
    ss_ref[:, 0:1] += jnp.sum(y, axis=1, keepdims=True)
    ss_ref[:, 1:2] += jnp.sum(y * y, axis=1, keepdims=True)

    @pl.when(jnp.logical_and(b == pl.num_programs(1) - 1,
                             l == pl.num_programs(2) - 1))
    def _finalize():
        inv_n = jnp.float32(1.0 / n_valid)
        mean = ss_ref[:, 0:1] * inv_n
        # Single-pass E[y^2]-E[y]^2 in f32; clamp guards cancellation going
        # slightly negative.  TODO(synk): Gram-matrix / shifted-sum accumulation
        # for tighter numerics at very large batch*length.
        var = jnp.maximum(ss_ref[:, 1:2] * inv_n - mean * mean, 0.0)
        scale = gb_ref[:, 0:1] * jax.lax.rsqrt(var + eps)
        shift = gb_ref[:, 1:2] - mean * scale
        ss_ref[:, 0:1] = scale
        ss_ref[:, 1:2] = shift


# ---------------------------------------------------------------------------
# Pass 2: recompute conv tile, apply fused BN affine + ReLU.
# Grid = (B, c_tiles, l_tiles); all axes independent (parallel).
# ---------------------------------------------------------------------------
def conv_bn_relu_kernel(x_ref, w_ref, ss_ref, o_ref, *,
                        K, dilation, stride, l_tile):
    y = _conv_tile(x_ref, w_ref, K=K, dilation=dilation, stride=stride,
                   l_tile=l_tile)
    scale = ss_ref[:, 0:1]
    shift = ss_ref[:, 1:2]
    o_ref[...] = jnp.maximum(y * scale + shift, 0.0).astype(o_ref.dtype)


# ---------------------------------------------------------------------------
# Wrapper
# ---------------------------------------------------------------------------
def _vmem_budget_bytes():
    """~80% of the physical VMEM of this generation (v5e/v6e ~102 MiB, v7x ~51 MiB)."""
    try:
        cap = pltpu.get_tpu_info().vmem_capacity_bytes
    except Exception:
        cap = 64 * 1024 * 1024            # conservative (v7x-sized) fallback
    return int(cap * 0.8)


def _pick_tiles(C_in, C_out, L_out, K, stride, dilation, in_bytes, budget):
    # Channel tile <= 128 (matches v5e's 4x128^2 MXU; fine on v6e/v7x).
    if C_out <= 128:
        c_tile = C_out
    else:
        c_tile = 128
        while C_out % c_tile:
            c_tile -= 8
    # Length tile: 512+ lanes already reaches ~85% of HBM roofline; take the
    # largest tile the generation's VMEM budget allows with double-buffering.
    if L_out <= 512:
        l_tile = L_out
    else:
        l_tile = 2048
        while l_tile > 128:
            w = (l_tile - 1) * stride + (K - 1) * dilation + 1
            need = (2 * C_in * w * in_bytes        # x window, double-buffered
                    + 2 * c_tile * l_tile * 4      # output tile, double-buffered
                    + c_tile * l_tile * 4          # f32 conv accumulator
                    + 2 * K * c_tile * C_in * in_bytes)
            if need <= budget // 2:                # headroom for compiler scratch
                break
            l_tile //= 2
        l_tile = min(l_tile, ((L_out + 127) // 128) * 128)
    return c_tile, l_tile


def conbr_block_pallas(x, weight, bias, gamma, beta, *,
                       stride=1, dilation=1, padding=2, eps=1e-5,
                       use_bf16_matmul=True):
    """Conv1d(padding, bias) -> BatchNorm1d (training mode) -> ReLU on TPU."""
    B, C_in, L = x.shape
    C_out, _, K = weight.shape
    L_out = (L + 2 * padding - dilation * (K - 1) - 1) // stride + 1

    # Training-mode BN subtracts the per-channel batch mean, which contains the
    # conv bias exactly, so the bias cancels bit-identically -> drop it.
    # TODO(synk): eval-mode BN (running stats) would need the bias re-applied.
    del bias

    compute_dtype = jnp.bfloat16 if use_bf16_matmul else x.dtype
    in_bytes = jnp.dtype(compute_dtype).itemsize

    budget = _vmem_budget_bytes()
    c_tile, l_tile = _pick_tiles(C_in, C_out, L_out, K, stride, dilation,
                                 in_bytes, budget)
    n_c = C_out // c_tile
    n_l = pl.cdiv(L_out, l_tile)
    L_out_pad = n_l * l_tile
    W = (l_tile - 1) * stride + (K - 1) * dilation + 1   # x window per tile

    # --- per-tile x windows with a (K-1)*dilation halo (no K-fold im2col) ---
    # Only the tiny halo is duplicated; the kernel reads x ~once per pass.
    # TODO(synk): a manual-DMA (memory_space=pl.ANY) variant could read the
    # overlapping windows straight from x_pad and skip this wrapper copy.
    need_in = (L_out_pad - 1) * stride + (K - 1) * dilation + 1
    right_pad = max(0, need_in - (L + padding))
    x_pad = jnp.pad(x.astype(compute_dtype),
                    ((0, 0), (0, 0), (padding, right_pad)))
    wins = [jax.lax.slice_in_dim(x_pad, t * l_tile * stride,
                                 t * l_tile * stride + W, axis=2)
            for t in range(n_l)]
    x_tiles = jnp.stack(wins, axis=1)                        # (B, n_l, C_in, W)

    w_t = weight.transpose(2, 0, 1).astype(compute_dtype)    # (K, C_out, C_in)
    gb = jnp.stack([gamma, beta], axis=1).astype(jnp.float32)  # (C_out, 2)

    cparams_stats = pltpu.CompilerParams(
        dimension_semantics=("parallel", "arbitrary", "arbitrary"),
        vmem_limit_bytes=budget)
    cparams_norm = pltpu.CompilerParams(
        dimension_semantics=("parallel", "parallel", "parallel"),
        vmem_limit_bytes=budget)

    # Pass 1: per-channel statistics -> fused (scale, shift), f32.
    # TODO(synk): on v7x (2 TCs) split c_tile when n_c == 1 so this reduction
    # pass also exposes >= 2 parallel grid steps.
    scale_shift = pl.pallas_call(
        functools.partial(bn_stats_kernel, K=K, dilation=dilation,
                          stride=stride, l_tile=l_tile,
                          n_valid=B * L_out, eps=eps),
        out_shape=jax.ShapeDtypeStruct((C_out, 2), jnp.float32),
        grid=(n_c, B, n_l),
        in_specs=[
            pl.BlockSpec((None, None, C_in, W), lambda c, b, l: (b, l, 0, 0)),
            pl.BlockSpec((K, c_tile, C_in), lambda c, b, l: (0, c, 0)),
            pl.BlockSpec((c_tile, 2), lambda c, b, l: (c, 0)),
        ],
        out_specs=pl.BlockSpec((c_tile, 2), lambda c, b, l: (c, 0)),
        compiler_params=cparams_stats,
    )(x_tiles, w_t, gb)

    # Pass 2: recompute conv tile, apply BN affine + ReLU, write directly in
    # (B, C_out, L) layout (no post-kernel transpose pass).
    out = pl.pallas_call(
        functools.partial(conv_bn_relu_kernel, K=K, dilation=dilation,
                          stride=stride, l_tile=l_tile),
        out_shape=jax.ShapeDtypeStruct((B, C_out, L_out_pad), x.dtype),
        grid=(B, n_c, n_l),
        in_specs=[
            pl.BlockSpec((None, None, C_in, W), lambda b, c, l: (b, l, 0, 0)),
            pl.BlockSpec((K, c_tile, C_in), lambda b, c, l: (0, c, 0)),
            pl.BlockSpec((c_tile, 2), lambda b, c, l: (c, 0)),
        ],
        out_specs=pl.BlockSpec((None, c_tile, l_tile), lambda b, c, l: (b, c, l)),
        compiler_params=cparams_norm,
    )(x_tiles, w_t, scale_shift)

    if L_out_pad != L_out:
        out = out[:, :, :L_out]
    return out


def conbr_block_ref(x, weight, bias, gamma, beta, *,
                    stride=1, dilation=1, padding=2, eps=1e-5):
    """Pure-JAX reference mirroring the PyTorch module (training-mode BN)."""
    y = jax.lax.conv_general_dilated(
        x, weight, window_strides=(stride,), padding=[(padding, padding)],
        rhs_dilation=(dilation,), dimension_numbers=('NCH', 'OIH', 'NCH'))
    y = y + bias[None, :, None]
    mean = jnp.mean(y, axis=(0, 2), keepdims=True)
    var = jnp.mean((y - mean) ** 2, axis=(0, 2), keepdims=True)
    y = (y - mean) * jax.lax.rsqrt(var + eps)
    y = y * gamma[None, :, None] + beta[None, :, None]
    return jnp.maximum(y, 0.0)


if __name__ == "__main__":
    # conbr_block(in_layer=4, out_layer=16, kernel_size=5, stride=1, dilation=1)
    B, C_in, C_out, L, K = 2, 4, 16, 16, 5
    stride, dilation = 1, 1

    key = jax.random.PRNGKey(0)
    kx, kw, kb = jax.random.split(key, 3)
    x = jax.random.normal(kx, (B, C_in, L), dtype=jnp.float32)
    weight = 0.1 * jax.random.normal(kw, (C_out, C_in, K), dtype=jnp.float32)
    bias = 0.05 * jax.random.normal(kb, (C_out,), dtype=jnp.float32)
    gamma = jnp.ones((C_out,), jnp.float32)    # BatchNorm1d default weight
    beta = jnp.zeros((C_out,), jnp.float32)    # BatchNorm1d default bias

    ref = conbr_block_ref(x, weight, bias, gamma, beta,
                          stride=stride, dilation=dilation)

    # Default perf path: bf16 MXU operands, f32 statistics / epilogue.
    out_bf16 = jax.block_until_ready(
        conbr_block_pallas(x, weight, bias, gamma, beta,
                           stride=stride, dilation=dilation,
                           use_bf16_matmul=True))
    assert out_bf16.shape == ref.shape == (B, C_out, L)
    err_bf16 = float(jnp.max(jnp.abs(out_bf16 - ref)))
    assert err_bf16 < 5e-2, f"bf16 path max abs err = {err_bf16}"

    # f32 operand path for tight numerical agreement.
    out_f32 = jax.block_until_ready(
        conbr_block_pallas(x, weight, bias, gamma, beta,
                           stride=stride, dilation=dilation,
                           use_bf16_matmul=False))
    assert out_f32.shape == ref.shape
    err_f32 = float(jnp.max(jnp.abs(out_f32 - ref)))
    assert err_f32 < 2e-3, f"f32 path max abs err = {err_f32}"

    print("KERNEL_OK")
</pallas_src>

<mosaic_0001>
module attributes {stable_mosaic.version = 11 : i64} {
  func.func @bn_stats_kernel(%arg0: i32, %arg1: i32, %arg2: i32, %arg3: memref<1x1x4x20xbf16, #tpu.memory_space<vmem>>, %arg4: memref<5x16x4xbf16, #tpu.memory_space<vmem>>, %arg5: memref<16x2xf32, #tpu.memory_space<vmem>>, %arg6: memref<16x2xf32, #tpu.memory_space<vmem>>) attributes {dimension_semantics = [#tpu.dimension_semantics<parallel>, #tpu.dimension_semantics<arbitrary>, #tpu.dimension_semantics<arbitrary>], iteration_bounds = array<i64: 1, 2, 1>, scalar_prefetch = 0 : i64, scratch_operands = 0 : i64, tpu.core_type = #tpu.core_type<tc>, window_params = [{transform_indices = @transform_0, window_bounds = array<i64: 1, 1, 4, 20>}, {transform_indices = @transform_1, window_bounds = array<i64: 5, 16, 4>}, {transform_indices = @transform_2, window_bounds = array<i64: 16, 2>}, {transform_indices = @transform_3, window_bounds = array<i64: 16, 2>}]} {
    %c0_i32 = arith.constant 0 : i32
    %0 = arith.cmpi eq, %arg1, %c0_i32 : i32
    %c0_i32_0 = arith.constant 0 : i32
    %1 = arith.cmpi eq, %arg2, %c0_i32_0 : i32
    %2 = arith.andi %0, %1 : i1
    %3 = arith.extui %2 : i1 to i32
    %c0_i32_1 = arith.constant 0 : i32
    %4 = arith.cmpi ne, %3, %c0_i32_1 : i32
    scf.if %4 {
      %cst_49 = arith.constant 0.000000e+00 : f32
      %52 = vector.broadcast %cst_49 : f32 to vector<16x2xf32>
      %c0_50 = arith.constant 0 : index
      %c0_51 = arith.constant 0 : index
      %53 = vector.load %arg6[%c0_50, %c0_51] : memref<16x2xf32, #tpu.memory_space<vmem>>, vector<16x2xf32>
      tpu.vector_store %arg6[%c0_50, %c0_51], %52 {strides = array<i32>} : memref<16x2xf32, #tpu.memory_space<vmem>>, vector<16x2xf32>,
    } else {
    }
    %cst = arith.constant 0.000000e+00 : f32
    %5 = vector.broadcast %cst : f32 to vector<16x16xf32>
    %c0 = arith.constant 0 : index
    %c0_2 = arith.constant 0 : index
    %c0_3 = arith.constant 0 : index
    %c0_4 = arith.constant 0 : index
    %6 = vector.load %arg3[%c0, %c0_2, %c0_3, %c0_4] : memref<1x1x4x20xbf16, #tpu.memory_space<vmem>>, vector<1x1x4x16xbf16>
    %7 = vector.shape_cast %6 : vector<1x1x4x16xbf16> to vector<4x16xbf16>
    %c0_5 = arith.constant 0 : index
    %c0_6 = arith.constant 0 : index
    %c0_7 = arith.constant 0 : index
    %8 = vector.load %arg4[%c0_5, %c0_6, %c0_7] : memref<5x16x4xbf16, #tpu.memory_space<vmem>>, vector<1x16x4xbf16>
    %9 = vector.shape_cast %8 : vector<1x16x4xbf16> to vector<16x4xbf16>
    %cst_8 = arith.constant dense<0.000000e+00> : vector<16x16xf32>
    %10 = tpu.matmul %9, %7, %cst_8 {dimension_numbers = #tpu.dot_dimension_numbers<[1], [0], [0], [1], [0, 0, 1, 1], [], []>} : vector<16x4xbf16>, vector<4x16xbf16>, vector<16x16xf32> -> vector<16x16xf32>
    %11 = arith.addf %5, %10 : vector<16x16xf32>
    %c0_9 = arith.constant 0 : index
    %c0_10 = arith.constant 0 : index
    %c0_11 = arith.constant 0 : index
    %c1 = arith.constant 1 : index
    %12 = vector.load %arg3[%c0_9, %c0_10, %c0_11, %c1] : memref<1x1x4x20xbf16, #tpu.memory_space<vmem>>, vector<1x1x4x16xbf16>
    %13 = vector.shape_cast %12 : vector<1x1x4x16xbf16> to vector<4x16xbf16>
    %c1_12 = arith.constant 1 : index
    %c0_13 = arith.constant 0 : index
    %c0_14 = arith.constant 0 : index
    %14 = vector.load %arg4[%c1_12, %c0_13, %c0_14] : memref<5x16x4xbf16, #tpu.memory_space<vmem>>, vector<1x16x4xbf16>
    %15 = vector.shape_cast %14 : vector<1x16x4xbf16> to vector<16x4xbf16>
    %cst_15 = arith.constant dense<0.000000e+00> : vector<16x16xf32>
    %16 = tpu.matmul %15, %13, %cst_15 {dimension_numbers = #tpu.dot_dimension_numbers<[1], [0], [0], [1], [0, 0, 1, 1], [], []>} : vector<16x4xbf16>, vector<4x16xbf16>, vector<16x16xf32> -> vector<16x16xf32>
    %17 = arith.addf %11, %16 : vector<16x16xf32>
    %c0_16 = arith.constant 0 : index
    %c0_17 = arith.constant 0 : index
    %c0_18 = arith.constant 0 : index
    %c2 = arith.constant 2 : index
    %18 = vector.load %arg3[%c0_16, %c0_17, %c0_18, %c2] : memref<1x1x4x20xbf16, #tpu.memory_space<vmem>>, vector<1x1x4x16xbf16>
    %19 = vector.shape_cast %18 : vector<1x1x4x16xbf16> to vector<4x16xbf16>
    %c2_19 = arith.constant 2 : index
    %c0_20 = arith.constant 0 : index
    %c0_21 = arith.constant 0 : index
    %20 = vector.load %arg4[%c2_19, %c0_20, %c0_21] : memref<5x16x4xbf16, #tpu.memory_space<vmem>>, vector<1x16x4xbf16>
    %21 = vector.shape_cast %20 : vector<1x16x4xbf16> to vector<16x4xbf16>
    %cst_22 = arith.constant dense<0.000000e+00> : vector<16x16xf32>
    %22 = tpu.matmul %21, %19, %cst_22 {dimension_numbers = #tpu.dot_dimension_numbers<[1], [0], [0], [1], [0, 0, 1, 1], [], []>} : vector<16x4xbf16>, vector<4x16xbf16>, vector<16x16xf32> -> vector<16x16xf32>
    %23 = arith.addf %17, %22 : vector<16x16xf32>
    %c0_23 = arith.constant 0 : index
    %c0_24 = arith.constant 0 : index
    %c0_25 = arith.constant 0 : index
    %c3 = arith.constant 3 : index
    %24 = vector.load %arg3[%c0_23, %c0_24, %c0_25, %c3] : memref<1x1x4x20xbf16, #tpu.memory_space<vmem>>, vector<1x1x4x16xbf16>
    %25 = vector.shape_cast %24 : vector<1x1x4x16xbf16> to vector<4x16xbf16>
    %c3_26 = arith.constant 3 : index
    %c0_27 = arith.constant 0 : index
    %c0_28 = arith.constant 0 : index
    %26 = vector.load %arg4[%c3_26, %c0_27, %c0_28] : memref<5x16x4xbf16, #tpu.memory_space<vmem>>, vector<1x16x4xbf16>
    %27 = vector.shape_cast %26 : vector<1x16x4xbf16> to vector<16x4xbf16>
    %cst_29 = arith.constant dense<0.000000e+00> : vector<16x16xf32>
    %28 = tpu.matmul %27, %25, %cst_29 {dimension_numbers = #tpu.dot_dimension_numbers<[1], [0], [0], [1], [0, 0, 1, 1], [], []>} : vector<16x4xbf16>, vector<4x16xbf16>, vector<16x16xf32> -> vector<16x16xf32>
    %29 = arith.addf %23, %28 : vector<16x16xf32>
    %c0_30 = arith.constant 0 : index
    %c0_31 = arith.constant 0 : index
    %c0_32 = arith.constant 0 : index
    %c4 = arith.constant 4 : index
    %30 = vector.load %arg3[%c0_30, %c0_31, %c0_32, %c4] : memref<1x1x4x20xbf16, #tpu.memory_space<vmem>>, vector<1x1x4x16xbf16>
    %31 = vector.shape_cast %30 : vector<1x1x4x16xbf16> to vector<4x16xbf16>
    %c4_33 = arith.constant 4 : index
    %c0_34 = arith.constant 0 : index
    %c0_35 = arith.constant 0 : index
    %32 = vector.load %arg4[%c4_33, %c0_34, %c0_35] : memref<5x16x4xbf16, #tpu.memory_space<vmem>>, vector<1x16x4xbf16>
    %33 = vector.shape_cast %32 : vector<1x16x4xbf16> to vector<16x4xbf16>
    %cst_36 = arith.constant dense<0.000000e+00> : vector<16x16xf32>
    %34 = tpu.matmul %33, %31, %cst_36 {dimension_numbers = #tpu.dot_dimension_numbers<[1], [0], [0], [1], [0, 0, 1, 1], [], []>} : vector<16x4xbf16>, vector<4x16xbf16>, vector<16x16xf32> -> vector<16x16xf32>
    %35 = arith.addf %29, %34 : vector<16x16xf32>
    %c0_37 = arith.constant 0 : index
    %c0_38 = arith.constant 0 : index
    %36 = vector.load %arg6[%c0_37, %c0_38] : memref<16x2xf32, #tpu.memory_space<vmem>>, vector<16x1xf32>
    %cst_39 = arith.constant dense<0.000000e+00> : vector<16xf32>
    %37 = vector.multi_reduction <add>, %35, %cst_39 [1] : vector<16x16xf32> to vector<16xf32>
    %38 = vector.shape_cast %37 : vector<16xf32> to vector<16x1xf32>
    %39 = arith.addf %36, %38 : vector<16x1xf32>
    %c0_40 = arith.constant 0 : index
    %c0_41 = arith.constant 0 : index
    %40 = vector.load %arg6[%c0_40, %c0_41] : memref<16x2xf32, #tpu.memory_space<vmem>>, vector<16x1xf32>
    tpu.vector_store %arg6[%c0_40, %c0_41], %39 {strides = array<i32>} : memref<16x2xf32, #tpu.memory_space<vmem>>, vector<16x1xf32>,
    %c0_42 = arith.constant 0 : index
    %c1_43 = arith.constant 1 : index
    %41 = vector.load %arg6[%c0_42, %c1_43] : memref<16x2xf32, #tpu.memory_space<vmem>>, vector<16x1xf32>
    %42 = arith.mulf %35, %35 : vector<16x16xf32>
    %cst_44 = arith.constant dense<0.000000e+00> : vector<16xf32>
    %43 = vector.multi_reduction <add>, %42, %cst_44 [1] : vector<16x16xf32> to vector<16xf32>
    %44 = vector.shape_cast %43 : vector<16xf32> to vector<16x1xf32>
    %45 = arith.addf %41, %44 : vector<16x1xf32>
    %c0_45 = arith.constant 0 : index
    %c1_46 = arith.constant 1 : index
    %46 = vector.load %arg6[%c0_45, %c1_46] : memref<16x2xf32, #tpu.memory_space<vmem>>, vector<16x1xf32>
    tpu.vector_store %arg6[%c0_45, %c1_46], %45 {strides = array<i32>} : memref<16x2xf32, #tpu.memory_space<vmem>>, vector<16x1xf32>,
    %c1_i32 = arith.constant 1 : i32
    %47 = arith.cmpi eq, %arg1, %c1_i32 : i32
    %c0_i32_47 = arith.constant 0 : i32
    %48 = arith.cmpi eq, %arg2, %c0_i32_47 : i32
    %49 = arith.andi %47, %48 : i1
    %50 = arith.extui %49 : i1 to i32
    %c0_i32_48 = arith.constant 0 : i32
    %51 = arith.cmpi ne, %50, %c0_i32_48 : i32
    scf.if %51 {
      %c0_49 = arith.constant 0 : index
      %c0_50 = arith.constant 0 : index
      %52 = vector.load %arg6[%c0_49, %c0_50] : memref<16x2xf32, #tpu.memory_space<vmem>>, vector<16x1xf32>
      %cst_51 = arith.constant 3.125000e-02 : f32
      %53 = vector.broadcast %cst_51 : f32 to vector<16x1xf32>
      %54 = arith.mulf %52, %53 : vector<16x1xf32>
      %c0_52 = arith.constant 0 : index
      %c1_53 = arith.constant 1 : index
      %55 = vector.load %arg6[%c0_52, %c1_53] : memref<16x2xf32, #tpu.memory_space<vmem>>, vector<16x1xf32>
      %cst_54 = arith.constant 3.125000e-02 : f32
      %56 = vector.broadcast %cst_54 : f32 to vector<16x1xf32>
      %57 = arith.mulf %55, %56 : vector<16x1xf32>
      %58 = arith.mulf %54, %54 : vector<16x1xf32>
      %59 = arith.subf %57, %58 : vector<16x1xf32>
      %cst_55 = arith.constant 0.000000e+00 : f32
      %60 = vector.broadcast %cst_55 : f32 to vector<16x1xf32>
      %61 = arith.maximumf %59, %60 : vector<16x1xf32>
      %c0_56 = arith.constant 0 : index
      %c0_57 = arith.constant 0 : index
      %62 = vector.load %arg5[%c0_56, %c0_57] : memref<16x2xf32, #tpu.memory_space<vmem>>, vector<16x1xf32>
      %cst_58 = arith.constant 9.99999974E-6 : f32
      %63 = vector.broadcast %cst_58 : f32 to vector<16x1xf32>
      %64 = arith.addf %61, %63 : vector<16x1xf32>
      %65 = math.rsqrt %64 : vector<16x1xf32>
      %66 = arith.mulf %62, %65 : vector<16x1xf32>
      %c0_59 = arith.constant 0 : index
      %c1_60 = arith.constant 1 : index
      %67 = vector.load %arg5[%c0_59, %c1_60] : memref<16x2xf32, #tpu.memory_space<vmem>>, vector<16x1xf32>
      %68 = arith.mulf %54, %66 : vector<16x1xf32>
      %69 = arith.subf %67, %68 : vector<16x1xf32>
      %c0_61 = arith.constant 0 : index
      %c0_62 = arith.constant 0 : index
      %70 = vector.load %arg6[%c0_61, %c0_62] : memref<16x2xf32, #tpu.memory_space<vmem>>, vector<16x1xf32>
      tpu.vector_store %arg6[%c0_61, %c0_62], %66 {strides = array<i32>} : memref<16x2xf32, #tpu.memory_space<vmem>>, vector<16x1xf32>,
      %c0_63 = arith.constant 0 : index
      %c1_64 = arith.constant 1 : index
      %71 = vector.load %arg6[%c0_63, %c1_64] : memref<16x2xf32, #tpu.memory_space<vmem>>, vector<16x1xf32>
      tpu.vector_store %arg6[%c0_63, %c1_64], %69 {strides = array<i32>} : memref<16x2xf32, #tpu.memory_space<vmem>>, vector<16x1xf32>,
    } else {
    }
    return
  }
  func.func @transform_0(%arg0: i32, %arg1: i32, %arg2: i32) -> (i32, i32, i32, i32) {
    %c0_i32 = arith.constant 0 : i32
    %c0_i32_0 = arith.constant 0 : i32
    %c0_i32_1 = arith.constant 0 : i32
    return %arg1, %arg2, %c0_i32, %c0_i32_0 : i32, i32, i32, i32
  }
  func.func @transform_1(%arg0: i32, %arg1: i32, %arg2: i32) -> (i32, i32, i32) {
    %c0_i32 = arith.constant 0 : i32
    %c0_i32_0 = arith.constant 0 : i32
    %c0_i32_1 = arith.constant 0 : i32
    return %c0_i32, %arg0, %c0_i32_0 : i32, i32, i32
  }
  func.func @transform_2(%arg0: i32, %arg1: i32, %arg2: i32) -> (i32, i32) {
    %c0_i32 = arith.constant 0 : i32
    %c0_i32_0 = arith.constant 0 : i32
    return %arg0, %c0_i32 : i32, i32
  }
  func.func @transform_3(%arg0: i32, %arg1: i32, %arg2: i32) -> (i32, i32) {
    %c0_i32 = arith.constant 0 : i32
    %c0_i32_0 = arith.constant 0 : i32
    return %arg0, %c0_i32 : i32, i32
  }
}

</mosaic_0001>

<llo_original>
// kernel: tpu_custom_call.1
$region0: #{tpu_custom_call.1}
  #allocation0 [shape = 'u32[]', space=smem, size = 0x4, offset = 0x4, fixed_abs, tag = 'smem constant byte address 0x4 - core index']
  #allocation1 [shape = 'u32[144,128]{1,0:T(1,128)}', space=vmem, size = 0x12000, scoped, tag = 'internal scratch']
  %s0 = inlined_call_operand.vmem [shape: bf16[2,1,4,20], index: 0, kind: input, shape index: {}]
  %s1 = inlined_call_operand.vmem [shape: bf16[5,16,4], index: 1, kind: input, shape index: {}]
  %s2 = inlined_call_operand.vmem [shape: f32[16,2], index: 2, kind: input, shape index: {}]
  %s3 = inlined_call_operand.vmem [shape: f32[16,2], index: 3, kind: output, shape index: {}]
  %s4 = sld [smem:[#allocation0]]
  $region53: #{tpu_custom_call.1} parent=0
    _
  %s6 = ssub.s32 1, %s4
  %s7 = scalar_select 0, %s6, %s4
  loop: start=0, step=1, limit=4
  $region2: #{tpu_custom_call.1} parent=0 // loop_pre_header
    _
  $region3: #{tpu_custom_call.1} parent=0 // loop_header
    %s9 = sphi 0, %s13
    %p10 = scmp.ge.s32.totalorder %s9, 4
    %s16 = sphi 0, %s35
    %s17 = sphi 0, %s31
    %s18 = sphi 0, %s27
    %s19 = sphi 0, %s16
    %s20 = sphi 0, %s17
    %s21 = sphi 0, %s18
    %s22 = sphi 0, %s19
    %s23 = sphi 0, %s20
    %s24 = sphi 0, %s21
    %s40 = sphi 0, %s42
    %s43 = sphi 0, %s40
    %s44 = sphi 0, %s43
    %s60 = sphi 0, %s44
    %s66 = sphi 0, %s68
    %s69 = sphi 0, %s66
    %s70 = sphi 0, %s69
    %s86 = sphi 0, %s70
    %s92 = sphi 0, %s94
    %s95 = sphi 0, %s92
    %s96 = sphi 0, %s95
    %s112 = sphi 0, %s96
    %s118 = sphi 0, %s120
    %s121 = sphi 0, %s118
    %s122 = sphi 0, %s121
    %s138 = sphi 0, %s122
  $region4: #{tpu_custom_call.1} parent=0 // loop_header_branch
    %12 = sbr.rel (%p10) target = $region8
  $region5: #{tpu_custom_call.1} parent=0 // loop_body
    %s14 = ssub.s32 %s9, 1
    %s15 = ssub.s32 %s9, 2
    %s25 = sadd.s32 1, %s18
    %p26 = scmp.ge.s32.totalorder %s25, 1
    %s27 = scalar_select %p26, 0, %s25
    %s28 = sadd.s32 1, %s17
    %s29 = scalar_select %p26, %s28, %s17
    %p30 = scmp.ge.s32.totalorder %s29, 2
    %s31 = scalar_select %p30, 0, %s29
    %s32 = sadd.s32 1, %s16
    %s33 = scalar_select %p30, %s32, %s16
    %p34 = scmp.ge.s32.totalorder %s33, 1
    %s35 = scalar_select %p34, 0, %s33
    %s36 = ssub.s32 %s17, %s31
    %s37 = ssub.s32 %s18, %s27
    %s38 = sor.u32 %s36, %s37
    %p39 = scmp.eq.s32.totalorder %s38, 0
    %s41 = sadd.s32 %s40, 1
    %s42 = scalar_select %p39, %s40, %s41
    %p45 = pneg %p39
    %p46 = scmp.eq.s32.totalorder %s9, 1
    %p47 = por %p45, %p46
    %p48 = scmp.ne.s32.totalorder %s40, %s43
    %p49 = scmp.eq.s32.totalorder %s9, 0
    %p50 = por %p48, %p49
    %p51 = scmp.ne.s32.totalorder %s40, %s43
    %p52 = scmp.eq.s32.totalorder %s14, 1
    %p53 = por %p51, %p52
    %p54 = scmp.ne.s32.totalorder %s43, %s44
    %p55 = scmp.eq.s32.totalorder %s14, 0
    %p56 = por %p54, %p55
    %p57 = scmp.ne.s32.totalorder %s43, %s44
    %p58 = scmp.eq.s32.totalorder %s15, 1
    %p59 = por %p57, %p58
    %p61 = scmp.ne.s32.totalorder %s44, %s60
    %p62 = scmp.eq.s32.totalorder %s15, 0
    %p63 = por %p61, %p62
    %s64 = ssub.s32 %s16, %s35
    %p65 = scmp.eq.s32.totalorder %s64, 0
    %s67 = sadd.s32 %s66, 1
    %s68 = scalar_select %p65, %s66, %s67
    %p71 = pneg %p65
    %p72 = scmp.eq.s32.totalorder %s9, 1
    %p73 = por %p71, %p72
    %p74 = scmp.ne.s32.totalorder %s66, %s69
    %p75 = scmp.eq.s32.totalorder %s9, 0
    %p76 = por %p74, %p75
    %p77 = scmp.ne.s32.totalorder %s66, %s69
    %p78 = scmp.eq.s32.totalorder %s14, 1
    %p79 = por %p77, %p78
    %p80 = scmp.ne.s32.totalorder %s69, %s70
    %p81 = scmp.eq.s32.totalorder %s14, 0
    %p82 = por %p80, %p81
    %p83 = scmp.ne.s32.totalorder %s69, %s70
    %p84 = scmp.eq.s32.totalorder %s15, 1
    %p85 = por %p83, %p84
    %p87 = scmp.ne.s32.totalorder %s70, %s86
    %p88 = scmp.eq.s32.totalorder %s15, 0
    %p89 = por %p87, %p88
    %s90 = ssub.s32 %s16, %s35
    %p91 = scmp.eq.s32.totalorder %s90, 0
    %s93 = sadd.s32 %s92, 1
    %s94 = scalar_select %p91, %s92, %s93
    %p97 = pneg %p91
    %p98 = scmp.eq.s32.totalorder %s9, 1
    %p99 = por %p97, %p98
    %p100 = scmp.ne.s32.totalorder %s92, %s95
    %p101 = scmp.eq.s32.totalorder %s9, 0
    %p102 = por %p100, %p101
    %p103 = scmp.ne.s32.totalorder %s92, %s95
    %p104 = scmp.eq.s32.totalorder %s14, 1
    %p105 = por %p103, %p104
    %p106 = scmp.ne.s32.totalorder %s95, %s96
    %p107 = scmp.eq.s32.totalorder %s14, 0
    %p108 = por %p106, %p107
    %p109 = scmp.ne.s32.totalorder %s95, %s96
    %p110 = scmp.eq.s32.totalorder %s15, 1
    %p111 = por %p109, %p110
    %p113 = scmp.ne.s32.totalorder %s96, %s112
    %p114 = scmp.eq.s32.totalorder %s15, 0
    %p115 = por %p113, %p114
    %s116 = ssub.s32 %s16, %s35
    %p117 = scmp.eq.s32.totalorder %s116, 0
    %s119 = sadd.s32 %s118, 1
    %s120 = scalar_select %p117, %s118, %s119
    %p123 = pneg %p117
    %p124 = scmp.eq.s32.totalorder %s9, 1
    %p125 = por %p123, %p124
    %p126 = scmp.ne.s32.totalorder %s118, %s121
    %p127 = scmp.eq.s32.totalorder %s9, 0
    %p128 = por %p126, %p127
    %p129 = scmp.ne.s32.totalorder %s118, %s121
    %p130 = scmp.eq.s32.totalorder %s14, 1
    %p131 = por %p129, %p130
    %p132 = scmp.ne.s32.totalorder %s121, %s122
    %p133 = scmp.eq.s32.totalorder %s14, 0
    %p134 = por %p132, %p133
    %p135 = scmp.ne.s32.totalorder %s121, %s122
    %p136 = scmp.eq.s32.totalorder %s15, 1
    %p137 = por %p135, %p136
    %p139 = scmp.ne.s32.totalorder %s122, %s138
    %p140 = scmp.eq.s32.totalorder %s15, 0
    %p141 = por %p139, %p140
    %p142 = scmp.le.s32.totalorder 1, %s9
    %p143 = scmp.lt.s32.totalorder %s9, 3
    %p144 = pnand %p142, %p143
    %p145 = pneg %p144
    // Predicated region
    $region9: #{tpu_custom_call.1} parent=5 // pred_check
      _
    $region10: #{tpu_custom_call.1} parent=5 // pred_check_branch
      %147 = sbr.rel (%p144) target = $region12
    $region11: #{tpu_custom_call.1} parent=5 // pred_region
      %s148 = ssub.s32 %s9, 1
      // Predicated region
      $region13: #{tpu_custom_call.1} parent=11 // pred_check
        %p149 = pneg %p82
      $region14: #{tpu_custom_call.1} parent=11 // pred_check_branch
        %151 = sbr.rel (%p149) target = $region16
      $region15: #{tpu_custom_call.1} parent=11 // pred_region
        %s152 = smul.u32 2, %s19
        %p153 = scmp.lt.s32.totalorder %s152, 1
        %s154 = scalar_select %p153, %s152, 1
        %s155 = smul.addr %s154, 4
        %s156 = scalar_lea.vmem %s1, %s155
        %s157 = smul.u32 2, %s19
      $region16: #{tpu_custom_call.1} parent=11 // pred_fallthru
        _
      // Predicated region
      $region17: #{tpu_custom_call.1} parent=11 // pred_check
        %p158 = pneg %p108
      $region18: #{tpu_custom_call.1} parent=11 // pred_check_branch
        %160 = sbr.rel (%p158) target = $region20
      $region19: #{tpu_custom_call.1} parent=11 // pred_region
        %s161 = smul.u32 2, %s19
        %p162 = scmp.lt.s32.totalorder %s161, 1
        %s163 = scalar_select %p162, %s161, 1
        %s164 = smul.addr %s163, 8
        %s165 = scalar_lea.vmem %s2, %s164
        %s166 = smul.u32 2, %s19
      $region20: #{tpu_custom_call.1} parent=11 // pred_fallthru
        _
    $region12: #{tpu_custom_call.1} parent=5 // pred_fallthru
      _
    %p167 = scmp.lt.s32.totalorder %s9, 2
    // Predicated region
    $region21: #{tpu_custom_call.1} parent=5 // pred_check
      %p168 = pneg %p167
    $region22: #{tpu_custom_call.1} parent=5 // pred_check_branch
      %170 = sbr.rel (%p168) target = $region24
    $region23: #{tpu_custom_call.1} parent=5 // pred_region
      // Predicated region
      $region25: #{tpu_custom_call.1} parent=23 // pred_check
        %p171 = pneg %p50
      $region26: #{tpu_custom_call.1} parent=23 // pred_check_branch
        %173 = sbr.rel (%p171) target = $region28
      $region27: #{tpu_custom_call.1} parent=23 // pred_region
        %p174 = scmp.lt.s32.totalorder %s17, 1
        %s175 = scalar_select %p174, %s17, 1
        %p176 = scmp.lt.s32.totalorder %s18, 0
        %s177 = scalar_select %p176, %s18, 0
        %s178 = sadd.s32 %s177, %s175
        %s179 = smul.addr %s178, 2
        %s180 = scalar_lea.vmem %s0, %s179
      $region28: #{tpu_custom_call.1} parent=23 // pred_fallthru
        _
    $region24: #{tpu_custom_call.1} parent=5 // pred_fallthru
      _
    %p181 = scmp.le.s32.totalorder 1, %s9
    %p182 = scmp.lt.s32.totalorder %s9, 3
    %p183 = pnand %p181, %p182
    %p184 = pneg %p183
    // Predicated region
    $region29: #{tpu_custom_call.1} parent=5 // pred_check
      _
    $region30: #{tpu_custom_call.1} parent=5 // pred_check_branch
      %186 = sbr.rel (%p183) target = $region32
    $region31: #{tpu_custom_call.1} parent=5 // pred_region
      %s187 = ssub.s32 %s9, 1
      %p188 = scmp.lt.s32.totalorder %s20, 1
      %s189 = scalar_select %p188, %s20, 1
      %p190 = scmp.lt.s32.totalorder %s21, 0
      %s191 = scalar_select %p190, %s21, 0
      %s192 = sadd.s32 %s191, %s189
      %s193 = smul.addr %s192, 2
      %s194 = scalar_lea.vmem %s0, %s193
      %p195 = pneg %p56
      %p196 = pneg %p53
      %s197 = smul.u32 2, %s19
      %p198 = scmp.lt.s32.totalorder %s197, 1
      %s199 = scalar_select %p198, %s197, 1
      %s200 = smul.addr %s199, 4
      %s201 = scalar_lea.vmem %s1, %s200
      %p202 = pneg %p82
      %p203 = pneg %p79
      %s204 = smul.u32 2, %s19
      %p205 = scmp.lt.s32.totalorder %s204, 1
      %s206 = scalar_select %p205, %s204, 1
      %s207 = smul.addr %s206, 8
      %s208 = scalar_lea.vmem %s2, %s207
      %p209 = pneg %p108
      %p210 = pneg %p105
      %p211 = pneg %p134
      %p212 = pneg %p131
      %s213 = smul.u32 2, %s19
      %p214 = scmp.lt.s32.totalorder %s213, 1
      %s215 = scalar_select %p214, %s213, 1
      %s216 = smul.addr %s215, 8
      %s217 = scalar_lea.vmem %s3, %s216
      %p218 = scmp.lt.s32.totalorder %s20, 1
      %s219 = scalar_select %p218, %s20, 1
      %p220 = scmp.lt.s32.totalorder %s21, 0
      %s221 = scalar_select %p220, %s21, 0
      %s222 = sadd.s32 %s221, %s219
      %s223 = smul.addr %s222, 2
      %s224 = scalar_lea.vmem %s0, %s223
      %s225 = smul.u32 2, %s19
      %p226 = scmp.lt.s32.totalorder %s225, 1
      %s227 = scalar_select %p226, %s225, 1
      %s228 = smul.addr %s227, 4
      %s229 = scalar_lea.vmem %s1, %s228
      %s230 = smul.u32 2, %s19
      %s231 = smul.u32 2, %s19
      %p232 = scmp.lt.s32.totalorder %s231, 1
      %s233 = scalar_select %p232, %s231, 1
      %s234 = smul.addr %s233, 8
      %s235 = scalar_lea.vmem %s2, %s234
      %s236 = smul.u32 2, %s19
      %s237 = smul.u32 2, %s19
      %p238 = scmp.lt.s32.totalorder %s237, 1
      %s239 = scalar_select %p238, %s237, 1
      %s240 = smul.addr %s239, 8
      %s241 = scalar_lea.vmem %s3, %s240
      %s242 = smul.u32 2, %s19
      %p244 = scmp.eq.s32.totalorder %s20, 0
      %p245 = scmp.eq.s32.totalorder %s21, 0
      %p246 = pnand %p244, %p245
      %p247 = pneg %p246
      // Predicated region
      $region33: #{tpu_custom_call.1} parent=31 // pred_check
        _
      $region34: #{tpu_custom_call.1} parent=31 // pred_check_branch
        %249 = sbr.rel (%p246) target = $region36
      $region35: #{tpu_custom_call.1} parent=31 // pred_region
        %vm250 = vcmask 15360
        %251 = vst.msk [vmem:[%s241] sm:$0xff] %vm250, 0.0
        %252 = vst.msk [vmem:[%s241 + $0x8] sm:$0xff] %vm250, 0.0
      $region36: #{tpu_custom_call.1} parent=31 // pred_fallthru
        _
      %v253 = vld [vmem:[%s224] sm:$0x3]
      %v254 = vld [vmem:[%s229] sm:$0xf]
      %v255 = vld [vmem:[%s229 + $0x4] sm:$0xf]
      %s256 = scalar_lea.vmem %s229, 8
      %v257 = vld [vmem:[%s256] sm:$0xf]
      %v258 = vld [vmem:[%s256 + $0x4] sm:$0xf]
      %v261 = vunpack.c.l.b16 %v257
      %v262 = vunpack.c.l.b16 %v258
      %v263 = vpack.c.b16 %v262, %v261
      %v266 = vunpack.c.l.s4 1983009808
      %v267 = vunpack.c.0.s8 %v266
      %v268 = vlaneseq
      %v269 = vshrl.u32 %v268, 7
      %v270 = vsub.s32 %v267, %v269
      %v271 = vrot.slane %v253, %v270
      %272 = vrot.lane.b32.xlu0 %v271, 127
      %v273 = vpop.permute.xlu0 %272
      %vm274 = vcmask 31744
      %v276 = vsel %vm274, %v263, 0
      %vm278 = vcmask 1041408
      %v280 = vsel %vm278, %v273, 0
      %282 = vmatprep.subr.bf16.mxu0 0
      %283 = vmatpush1.bf16.msra.mxu0 %v280
      %284 = vmatprep.subr.bf16.mxu0 0
      %285 = vmatpush1.bf16.msra.mxu0 0
      %286 = vmatprep.subr.bf16.mxu0 0
      %287 = vmatpush1.bf16.msra.mxu0 0
      %288 = vmatprep.subr.bf16.mxu0 0
      %289 = vmatpush1.bf16.msra.mxu0 0
      %290 = vmatprep.subr.bf16.mxu0 0
      %291 = vmatpush1.bf16.msra.mxu0 0
      %292 = vmatprep.subr.bf16.mxu0 0
      %293 = vmatpush1.bf16.msra.mxu0 0
      %294 = vmatprep.subr.bf16.mxu0 0
      %295 = vmatpush1.bf16.msra.mxu0 0
      %296 = vmatprep.subr.bf16.mxu0 0
      %297 = vmatpush1.bf16.msra.mxu0 0
      %298 = vmatprep.subr.bf16.mxu0 0
      %299 = vmatpush1.bf16.msra.mxu0 0
      %300 = vmatprep.subr.bf16.mxu0 0
      %301 = vmatpush1.bf16.msra.mxu0 0
      %302 = vmatprep.subr.bf16.mxu0 0
      %303 = vmatpush1.bf16.msra.mxu0 0
      %304 = vmatprep.subr.bf16.mxu0 0
      %305 = vmatpush1.bf16.msra.mxu0 0
      %306 = vmatprep.subr.bf16.mxu0 0
      %307 = vmatpush1.bf16.msra.mxu0 0
      %308 = vmatprep.subr.bf16.mxu0 0
      %309 = vmatpush1.bf16.msra.mxu0 0
      %310 = vmatprep.subr.bf16.mxu0 0
      %311 = vmatpush1.bf16.msra.mxu0 0
      %312 = vmatprep.subr.bf16.mxu0 0
      %313 = vmatpush1.bf16.msra.mxu0 0
      %314 = vmatprep.mubr.bf16.mxu0 0
      %315 = vmatmul.mubr.bf16.gmra.mrb[0].mxu0 %v276
      %v316 = vpop.f32.mrb[0].mxu0
      %v317 = vadd.f32 0.0, %v316
      %v318 = vpop.f32.mrb[0].mxu0
      %v319 = vpop.f32.mrb[0].mxu0
      %v320 = vadd.f32 0.0, %v319
      %v321 = vpop.f32.mrb[0].mxu0
      %322 = vdwg.mxu0
      %v325 = vunpack.c.l.b16 %v254
      %v326 = vunpack.c.l.b16 %v255
      %v327 = vpack.c.b16 %v326, %v325
      %v329 = vsel %vm274, %v327, 0
      %v332 = vsel %vm278, %v253, 0
      %334 = vmatprep.subr.bf16.mxu0 0
      %335 = vmatpush1.bf16.msra.mxu0 %v332
      %336 = vmatprep.subr.bf16.mxu0 0
      %337 = vmatpush1.bf16.msra.mxu0 0
      %338 = vmatprep.subr.bf16.mxu0 0
      %339 = vmatpush1.bf16.msra.mxu0 0
      %340 = vmatprep.subr.bf16.mxu0 0
      %341 = vmatpush1.bf16.msra.mxu0 0
      %342 = vmatprep.subr.bf16.mxu0 0
      %343 = vmatpush1.bf16.msra.mxu0 0
      %344 = vmatprep.subr.bf16.mxu0 0
      %345 = vmatpush1.bf16.msra.mxu0 0
      %346 = vmatprep.subr.bf16.mxu0 0
      %347 = vmatpush1.bf16.msra.mxu0 0
      %348 = vmatprep.subr.bf16.mxu0 0
      %349 = vmatpush1.bf16.msra.mxu0 0
      %350 = vmatprep.subr.bf16.mxu0 0
      %351 = vmatpush1.bf16.msra.mxu0 0
      %352 = vmatprep.subr.bf16.mxu0 0
      %353 = vmatpush1.bf16.msra.mxu0 0
      %354 = vmatprep.subr.bf16.mxu0 0
      %355 = vmatpush1.bf16.msra.mxu0 0
      %356 = vmatprep.subr.bf16.mxu0 0
      %357 = vmatpush1.bf16.msra.mxu0 0
      %358 = vmatprep.subr.bf16.mxu0 0
      %359 = vmatpush1.bf16.msra.mxu0 0
      %360 = vmatprep.subr.bf16.mxu0 0
      %361 = vmatpush1.bf16.msra.mxu0 0
      %362 = vmatprep.subr.bf16.mxu0 0
      %363 = vmatpush1.bf16.msra.mxu0 0
      %364 = vmatprep.subr.bf16.mxu0 0
      %365 = vmatpush1.bf16.msra.mxu0 0
      %366 = vmatprep.mubr.bf16.mxu0 0
      %367 = vmatmul.mubr.bf16.gmra.mrb[0].mxu0 %v329
      %v368 = vpop.f32.mrb[0].mxu0
      %v369 = vadd.f32 %v317, %v368
      %v370 = vpop.f32.mrb[0].mxu0
      %v371 = vpop.f32.mrb[0].mxu0
      %v372 = vadd.f32 %v320, %v371
      %v373 = vpop.f32.mrb[0].mxu0
      %374 = vdwg.mxu0
      %v375 = vld [vmem:[%s224] sm:$0x3]
      %s376 = scalar_lea.vmem %s229, 16
      %v377 = vld [vmem:[%s376] sm:$0xf]
      %v378 = vld [vmem:[%s376 + $0x4] sm:$0xf]
      %v381 = vunpack.c.l.b16 %v377
      %v382 = vunpack.c.l.b16 %v378
      %v383 = vpack.c.b16 %v382, %v381
      %v386 = vunpack.c.l.s4 1983009808
      %v387 = vunpack.c.0.s8 %v386
      %v388 = vlaneseq
      %v389 = vshrl.u32 %v388, 7
      %v390 = vsub.s32 %v387, %v389
      %v391 = vrot.slane %v375, %v390
      %392 = vrot.lane.b32.xlu0 %v391, 126
      %v393 = vpop.permute.xlu0 %392
      %v395 = vsel %vm274, %v383, 0
      %v398 = vsel %vm278, %v393, 0
      %400 = vmatprep.subr.bf16.mxu0 0
      %401 = vmatpush1.bf16.msra.mxu0 %v398
      %402 = vmatprep.subr.bf16.mxu0 0
      %403 = vmatpush1.bf16.msra.mxu0 0
      %404 = vmatprep.subr.bf16.mxu0 0
      %405 = vmatpush1.bf16.msra.mxu0 0
      %406 = vmatprep.subr.bf16.mxu0 0
      %407 = vmatpush1.bf16.msra.mxu0 0
      %408 = vmatprep.subr.bf16.mxu0 0
      %409 = vmatpush1.bf16.msra.mxu0 0
      %410 = vmatprep.subr.bf16.mxu0 0
      %411 = vmatpush1.bf16.msra.mxu0 0
      %412 = vmatprep.subr.bf16.mxu0 0
      %413 = vmatpush1.bf16.msra.mxu0 0
      %414 = vmatprep.subr.bf16.mxu0 0
      %415 = vmatpush1.bf16.msra.mxu0 0
      %416 = vmatprep.subr.bf16.mxu0 0
      %417 = vmatpush1.bf16.msra.mxu0 0
      %418 = vmatprep.subr.bf16.mxu0 0
      %419 = vmatpush1.bf16.msra.mxu0 0
      %420 = vmatprep.subr.bf16.mxu0 0
      %421 = vmatpush1.bf16.msra.mxu0 0
      %422 = vmatprep.subr.bf16.mxu0 0
      %423 = vmatpush1.bf16.msra.mxu0 0
      %424 = vmatprep.subr.bf16.mxu0 0
      %425 = vmatpush1.bf16.msra.mxu0 0
      %426 = vmatprep.subr.bf16.mxu0 0
      %427 = vmatpush1.bf16.msra.mxu0 0
      %428 = vmatprep.subr.bf16.mxu0 0
      %429 = vmatpush1.bf16.msra.mxu0 0
      %430 = vmatprep.subr.bf16.mxu0 0
      %431 = vmatpush1.bf16.msra.mxu0 0
      %432 = vmatprep.mubr.bf16.mxu0 0
      %433 = vmatmul.mubr.bf16.gmra.mrb[0].mxu0 %v395
      %v434 = vpop.f32.mrb[0].mxu0
      %v435 = vadd.f32 0.0, %v434
      %v436 = vpop.f32.mrb[0].mxu0
      %v437 = vpop.f32.mrb[0].mxu0
      %v438 = vadd.f32 0.0, %v437
      %v439 = vpop.f32.mrb[0].mxu0
      %440 = vdwg.mxu0
      %v441 = vadd.f32 %v369, %v435
      %v442 = vadd.f32 %v372, %v438
      %v443 = vld [vmem:[%s224] sm:$0x3]
      %s444 = scalar_lea.vmem %s229, 24
      %v445 = vld [vmem:[%s444] sm:$0xf]
      %v446 = vld [vmem:[%s444 + $0x4] sm:$0xf]
      %v449 = vunpack.c.l.b16 %v445
      %v450 = vunpack.c.l.b16 %v446
      %v451 = vpack.c.b16 %v450, %v449
      %v454 = vunpack.c.l.s4 1983009808
      %v455 = vunpack.c.0.s8 %v454
      %v456 = vlaneseq
      %v457 = vshrl.u32 %v456, 7
      %v458 = vsub.s32 %v455, %v457
      %v459 = vrot.slane %v443, %v458
      %460 = vrot.lane.b32.xlu0 %v459, 125
      %v461 = vpop.permute.xlu0 %460
      %v463 = vsel %vm274, %v451, 0
      %v466 = vsel %vm278, %v461, 0
      %468 = vmatprep.subr.bf16.mxu0 0
      %469 = vmatpush1.bf16.msra.mxu0 %v466
      %470 = vmatprep.subr.bf16.mxu0 0
      %471 = vmatpush1.bf16.msra.mxu0 0
      %472 = vmatprep.subr.bf16.mxu0 0
      %473 = vmatpush1.bf16.msra.mxu0 0
      %474 = vmatprep.subr.bf16.mxu0 0
      %475 = vmatpush1.bf16.msra.mxu0 0
      %476 = vmatprep.subr.bf16.mxu0 0
      %477 = vmatpush1.bf16.msra.mxu0 0
      %478 = vmatprep.subr.bf16.mxu0 0
      %479 = vmatpush1.bf16.msra.mxu0 0
      %480 = vmatprep.subr.bf16.mxu0 0
      %481 = vmatpush1.bf16.msra.mxu0 0
      %482 = vmatprep.subr.bf16.mxu0 0
      %483 = vmatpush1.bf16.msra.mxu0 0
      %484 = vmatprep.subr.bf16.mxu0 0
      %485 = vmatpush1.bf16.msra.mxu0 0
      %486 = vmatprep.subr.bf16.mxu0 0
      %487 = vmatpush1.bf16.msra.mxu0 0
      %488 = vmatprep.subr.bf16.mxu0 0
      %489 = vmatpush1.bf16.msra.mxu0 0
      %490 = vmatprep.subr.bf16.mxu0 0
      %491 = vmatpush1.bf16.msra.mxu0 0
      %492 = vmatprep.subr.bf16.mxu0 0
      %493 = vmatpush1.bf16.msra.mxu0 0
      %494 = vmatprep.subr.bf16.mxu0 0
      %495 = vmatpush1.bf16.msra.mxu0 0
      %496 = vmatprep.subr.bf16.mxu0 0
      %497 = vmatpush1.bf16.msra.mxu0 0
      %498 = vmatprep.subr.bf16.mxu0 0
      %499 = vmatpush1.bf16.msra.mxu0 0
      %500 = vmatprep.mubr.bf16.mxu0 0
      %501 = vmatmul.mubr.bf16.gmra.mrb[0].mxu0 %v463
      %v502 = vpop.f32.mrb[0].mxu0
      %v503 = vadd.f32 0.0, %v502
      %v504 = vpop.f32.mrb[0].mxu0
      %v505 = vpop.f32.mrb[0].mxu0
      %v506 = vadd.f32 0.0, %v505
      %v507 = vpop.f32.mrb[0].mxu0
      %508 = vdwg.mxu0
      %v509 = vadd.f32 %v441, %v503
      %v510 = vadd.f32 %v442, %v506
      %v511 = vld [vmem:[%s224] sm:$0x3]
      %s512 = scalar_lea.vmem %s229, 32
      %v513 = vld [vmem:[%s512] sm:$0xf]
      %v514 = vld [vmem:[%s512 + $0x4] sm:$0xf]
      %v517 = vunpack.c.l.b16 %v513
      %v518 = vunpack.c.l.b16 %v514
      %v519 = vpack.c.b16 %v518, %v517
      %v522 = vunpack.c.l.s4 1983009808
      %v523 = vunpack.c.0.s8 %v522
      %v524 = vlaneseq
      %v525 = vshrl.u32 %v524, 7
      %v526 = vsub.s32 %v523, %v525
      %v527 = vrot.slane %v511, %v526
      %528 = vrot.lane.b32.xlu0 %v527, 124
      %v529 = vpop.permute.xlu0 %528
      %v531 = vsel %vm274, %v519, 0
      %v534 = vsel %vm278, %v529, 0
      %536 = vmatprep.subr.bf16.mxu0 0
      %537 = vmatpush1.bf16.msra.mxu0 %v534
      %538 = vmatprep.subr.bf16.mxu0 0
      %539 = vmatpush1.bf16.msra.mxu0 0
      %540 = vmatprep.subr.bf16.mxu0 0
      %541 = vmatpush1.bf16.msra.mxu0 0
      %542 = vmatprep.subr.bf16.mxu0 0
      %543 = vmatpush1.bf16.msra.mxu0 0
      %544 = vmatprep.subr.bf16.mxu0 0
      %545 = vmatpush1.bf16.msra.mxu0 0
      %546 = vmatprep.subr.bf16.mxu0 0
      %547 = vmatpush1.bf16.msra.mxu0 0
      %548 = vmatprep.subr.bf16.mxu0 0
      %549 = vmatpush1.bf16.msra.mxu0 0
      %550 = vmatprep.subr.bf16.mxu0 0
      %551 = vmatpush1.bf16.msra.mxu0 0
      %552 = vmatprep.subr.bf16.mxu0 0
      %553 = vmatpush1.bf16.msra.mxu0 0
      %554 = vmatprep.subr.bf16.mxu0 0
      %555 = vmatpush1.bf16.msra.mxu0 0
      %556 = vmatprep.subr.bf16.mxu0 0
      %557 = vmatpush1.bf16.msra.mxu0 0
      %558 = vmatprep.subr.bf16.mxu0 0
      %559 = vmatpush1.bf16.msra.mxu0 0
      %560 = vmatprep.subr.bf16.mxu0 0
      %561 = vmatpush1.bf16.msra.mxu0 0
      %562 = vmatprep.subr.bf16.mxu0 0
      %563 = vmatpush1.bf16.msra.mxu0 0
      %564 = vmatprep.subr.bf16.mxu0 0
      %565 = vmatpush1.bf16.msra.mxu0 0
      %566 = vmatprep.subr.bf16.mxu0 0
      %567 = vmatpush1.bf16.msra.mxu0 0
      %568 = vmatprep.mubr.bf16.mxu0 0
      %569 = vmatmul.mubr.bf16.gmra.mrb[0].mxu0 %v531
      %v570 = vpop.f32.mrb[0].mxu0
      %v571 = vadd.f32 0.0, %v570
      %v572 = vpop.f32.mrb[0].mxu0
      %v573 = vpop.f32.mrb[0].mxu0
      %v574 = vadd.f32 0.0, %v573
      %v575 = vpop.f32.mrb[0].mxu0
      %576 = vdwg.mxu0
      %v577 = vadd.f32 %v509, %v571
      %v578 = vadd.f32 %v510, %v574
      %v579 = vld [vmem:[%s241] sm:$0xff]
      %v580 = vld [vmem:[%s241 + $0x8] sm:$0xff]
      %vm581 = vcmask 130048
      %v582 = vsel %vm581, %v577, 0.0
      %583 = vadd.xlane.f32.xlu0 %v582
      %v584 = vpop.xlane.xlu0 %583
      %v585 = vsel %vm581, %v578, 0.0
      %586 = vadd.xlane.f32.xlu0 %v585
      %v587 = vpop.xlane.xlu0 %586
      %v588 = vadd.f32 %v579, %v584
      %v589 = vadd.f32 %v580, %v587
      %vm590 = vcmask 7168
      %591 = vst.msk [vmem:[%s241] sm:$0xff] %vm590, %v588
      %592 = vst.msk [vmem:[%s241 + $0x8] sm:$0xff] %vm590, %v589
      %v593 = vld [vmem:[%s241] sm:$0xff]
      %v594 = vld [vmem:[%s241 + $0x8] sm:$0xff]
      %v595 = vmul.f32 %v577, %v577
      %v596 = vmul.f32 %v578, %v578
      %v597 = vsel %vm581, %v595, 0.0
      %598 = vadd.xlane.f32.xlu0 %v597
      %v599 = vpop.xlane.xlu0 %598
      %v600 = vsel %vm581, %v596, 0.0
      %601 = vadd.xlane.f32.xlu0 %v600
      %v602 = vpop.xlane.xlu0 %601
      %v603 = vadd.f32 %v593, %v599
      %v604 = vadd.f32 %v594, %v602
      %vm605 = vcmask 15368
      %606 = vst.msk [vmem:[%s241] sm:$0xff] %vm605, %v603
      %607 = vst.msk [vmem:[%s241 + $0x8] sm:$0xff] %vm605, %v604
      %p608 = scmp.eq.s32.totalorder %s20, 1
      %p609 = pnand %p608, %p245
      %p610 = pneg %p609
      // Predicated region
      $region37: #{tpu_custom_call.1} parent=31 // pred_check
        _
      $region38: #{tpu_custom_call.1} parent=31 // pred_check_branch
        %612 = sbr.rel (%p609) target = $region40
      $region39: #{tpu_custom_call.1} parent=31 // pred_region
        %v613 = vld [vmem:[%s241] sm:$0xff]
        %v614 = vld [vmem:[%s241 + $0x8] sm:$0xff]
        %v615 = vmul.f32 %v613, 0.03125
        %v616 = vmul.f32 %v614, 0.03125
        %v617 = vmul.f32 %v615, %v615
        %v618 = vmul.f32 %v616, %v616
        %621 = vrot.lane.b32.xlu0 %v617, 1
        %v622 = vpop.permute.xlu0 %621
        %623 = vrot.lane.b32.xlu0 %v618, 1
        %v624 = vpop.permute.xlu0 %623
        %v627 = vsub.f32 %v615, %v622
        %v628 = vsub.f32 %v616, %v624
        %v629 = vmax.f32 %v627, 0.0
        %v630 = vmax.f32 %v628, 0.0
        %v631 = vld [vmem:[%s235] sm:$0xff]
        %v632 = vld [vmem:[%s235 + $0x8] sm:$0xff]
        %v633 = vadd.f32 %v629, 1e-05
        %v634 = vadd.f32 %v630, 1e-05
        %v635 = vrsqrt.pop %v633
        %v636 = vrsqrt.pop %v634
        %639 = vrot.lane.b32.xlu0 %v635, 127
        %v640 = vpop.permute.xlu0 %639
        %641 = vrot.lane.b32.xlu0 %v636, 127
        %v642 = vpop.permute.xlu0 %641
        %v645 = vmul.f32 %v631, %v640
        %v646 = vmul.f32 %v632, %v642
        %v647 = vmul.f32 %v615, %v645
        %v648 = vmul.f32 %v616, %v646
        %651 = vrot.lane.b32.xlu0 %v647, 1
        %v652 = vpop.permute.xlu0 %651
        %653 = vrot.lane.b32.xlu0 %v648, 1
        %v654 = vpop.permute.xlu0 %653
        %v657 = vsub.f32 %v631, %v652
        %v658 = vsub.f32 %v632, %v654
        %659 = vst.msk [vmem:[%s241] sm:$0xff] %vm590, %v645
        %660 = vst.msk [vmem:[%s241 + $0x8] sm:$0xff] %vm590, %v646
        %661 = vst.msk [vmem:[%s241] sm:$0xff] %vm605, %v657
        %662 = vst.msk [vmem:[%s241 + $0x8] sm:$0xff] %vm605, %v658
      $region40: #{tpu_custom_call.1} parent=31 // pred_fallthru
        _
      %s663 = smul.u32 2, %s19
      %p664 = scmp.lt.s32.totalorder %s663, 1
      %s665 = scalar_select %p664, %s663, 1
      %s666 = smul.addr %s665, 8
      %s667 = scalar_lea.vmem %s3, %s666
      // Predicated region
      $region41: #{tpu_custom_call.1} parent=31 // pred_check
        %p668 = pneg %p131
      $region42: #{tpu_custom_call.1} parent=31 // pred_check_branch
        %670 = sbr.rel (%p668) target = $region44
      $region43: #{tpu_custom_call.1} parent=31 // pred_region
        %s671 = smul.u32 2, %s19
      $region44: #{tpu_custom_call.1} parent=31 // pred_fallthru
        _
      // Predicated region
      $region45: #{tpu_custom_call.1} parent=31 // pred_check
        %p672 = pneg %p131
      $region46: #{tpu_custom_call.1} parent=31 // pred_check_branch
        %674 = sbr.rel (%p672) target = $region48
      $region47: #{tpu_custom_call.1} parent=31 // pred_region
        %s675 = smul.u32 2, %s19
        %p676 = scmp.lt.s32.totalorder %s675, 1
        %s677 = scalar_select %p676, %s675, 1
        %s678 = smul.addr %s677, 8
        %s679 = scalar_lea.vmem %s3, %s678
      $region48: #{tpu_custom_call.1} parent=31 // pred_fallthru
        _
    $region32: #{tpu_custom_call.1} parent=5 // pred_fallthru
      _
    %p680 = scmp.le.s32.totalorder 2, %s9
    // Predicated region
    $region49: #{tpu_custom_call.1} parent=5 // pred_check
      %p681 = pneg %p680
    $region50: #{tpu_custom_call.1} parent=5 // pred_check_branch
      %683 = sbr.rel (%p681) target = $region52
    $region51: #{tpu_custom_call.1} parent=5 // pred_region
      %s684 = ssub.s32 %s9, 2
    $region52: #{tpu_custom_call.1} parent=5 // pred_fallthru
      _
  $region6: #{tpu_custom_call.1} parent=0 // loop_footer
    %s13 = sadd.s32 1, %s9
  $region7: #{tpu_custom_call.1} parent=0 // loop_footer_branch
    %8 = sbr.rel target = $region3
  $region8: #{tpu_custom_call.1} parent=0 // loop_exit
    _

</llo_original>
